<compile_context>
chip_gen: v6e
topology: v6e:2x2x1
jax: 0.10.0
libtpu: 0.0.40
codegen_flags: <defaults>
</compile_context>

<pallas_src>
import math

import jax
import jax.numpy as jnp
from jax import lax
from jax.experimental import pallas as pl
from jax.experimental.pallas import tpu as pltpu

_INV_SQRT2 = 1.0 / math.sqrt(2.0)


def _adapter_kernel(x_ref, w1_ref, b1_ref, w2_ref, b2_ref, o_ref):
    # x_ref: (tm, Ep)   w1: (Ep, Ap)   b1: (1, Ap) f32
    # w2:    (Ap, Ep)   b2: (1, Ep) f32   o_ref: (tm, Ep)
    x = x_ref[...]  # native dtype -> straight to the MXU

    # Linear 1 (MXU, f32 accumulation) + f32 bias.
    h = jnp.dot(x, w1_ref[...], preferred_element_type=jnp.float32)
    h = h + b1_ref[...]

    # Exact GELU (erf form), matching torch.nn.GELU() default.
    h = 0.5 * h * (1.0 + lax.erf(h * _INV_SQRT2))

    # Linear 2 (MXU, f32 accumulation); feed MXU in the weights' native dtype.
    y = jnp.dot(h.astype(w2_ref.dtype), w2_ref[...],
                preferred_element_type=jnp.float32)

    # Fused epilogue: bias + residual in f32, single downcast + lane-dense store.
    o_ref[...] = (x.astype(jnp.float32) + y + b2_ref[...]).astype(o_ref.dtype)


def _round_up(v, m):
    return (v + m - 1) // m * m


def _choose_block_m(n_rows, e_pad, a_pad, itemsize, vmem_budget_bytes):
    """Largest row tile whose (double-buffered) working set fits the budget."""
    row_align = max(8, 32 // itemsize)  # native sublane tile: f32 -> 8, bf16 -> 16
    # Grid-invariant weights + f32 biases (double-buffered by default).
    weight_bytes = 2 * (2 * e_pad * a_pad * itemsize + (a_pad + e_pad) * 4)
    block_m = 128
    for cand in (1024, 512, 256, 128):
        io_bytes = 4 * cand * e_pad * itemsize          # x + out, double-buffered
        scratch_bytes = cand * (a_pad + e_pad) * 4      # f32 intermediates
        if weight_bytes + io_bytes + scratch_bytes <= vmem_budget_bytes:
            block_m = cand
            break
    # Never tile past the problem itself.
    block_m = min(block_m, _round_up(n_rows, row_align))
    # Keep >= 2 grid steps on non-trivial problems so v7x can shard the row
    # axis across its two TensorCores (no-op on single-TC v5e/v6e).
    if n_rows >= 2 * 128:
        block_m = min(block_m, _round_up(-(-n_rows // 2), row_align))
    return block_m


def adapter_forward(x, w1, b1, w2, b2, *, block_m=None):
    """x: (B, S, E); w1: (E, A); b1: (A,); w2: (A, E); b2: (E,).
    Returns x + Linear2(GELU(Linear1(x))) computed in one fused Pallas kernel."""
    B, S, E = x.shape
    E_in, A = w1.shape
    assert E_in == E and w2.shape == (A, E)
    N = B * S
    itemsize = jnp.dtype(x.dtype).itemsize

    # Lane-dense padding: keep E and A at multiples of 128 (full MXU tiles,
    # unmasked vector stores).  Zero padding is exact for Linear/GELU/residual.
    Ep = _round_up(E, 128)
    Ap = _round_up(A, 128)

    # Per-generation VMEM capacity (v5e/v6e: 128 MiB, v7x: 64 MiB per TC).
    try:
        vmem_cap = int(pltpu.get_tpu_info().vmem_capacity_bytes)
    except Exception:  # conservative fallback, safe on every generation
        vmem_cap = 64 * 1024 * 1024

    if block_m is None:
        block_m = _choose_block_m(N, Ep, Ap, itemsize,
                                  vmem_budget_bytes=(vmem_cap * 3) // 5)
    Np = _round_up(N, block_m)

    x2 = x.reshape(N, E)
    if (Np, Ep) != (N, E):
        x2 = jnp.pad(x2, ((0, Np - N), (0, Ep - E)))
    w1p = jnp.pad(w1, ((0, Ep - E), (0, Ap - A))) if (Ep, Ap) != (E, A) else w1
    w2p = jnp.pad(w2, ((0, Ap - A), (0, Ep - E))) if (Ep, Ap) != (E, A) else w2
    # Biases are kept/passed in f32 so the epilogue needs no per-tile casts.
    b1p = jnp.pad(b1.astype(jnp.float32), (0, Ap - A)).reshape(1, Ap)
    b2p = jnp.pad(b2.astype(jnp.float32), (0, Ep - E)).reshape(1, Ep)

    grid = (Np // block_m,)

    cost = pl.CostEstimate(
        flops=4 * N * E * A,                        # two matmuls
        transcendentals=N * A,                      # erf per hidden activation
        bytes_accessed=(2 * Np * Ep * itemsize      # x in + out
                        + 2 * Ep * Ap * itemsize    # weights
                        + (Ap + Ep) * 4),           # f32 biases
    )

    out = pl.pallas_call(
        _adapter_kernel,
        out_shape=jax.ShapeDtypeStruct((Np, Ep), x.dtype),
        grid_spec=pltpu.PrefetchScalarGridSpec(
            num_scalar_prefetch=0,
            grid=grid,
            in_specs=[
                pl.BlockSpec((block_m, Ep), lambda i: (i, 0)),   # x rows
                pl.BlockSpec((Ep, Ap), lambda i: (0, 0)),        # W1 (grid-invariant)
                pl.BlockSpec((1, Ap), lambda i: (0, 0)),         # b1 (f32)
                pl.BlockSpec((Ap, Ep), lambda i: (0, 0)),        # W2 (grid-invariant)
                pl.BlockSpec((1, Ep), lambda i: (0, 0)),         # b2 (f32)
            ],
            out_specs=pl.BlockSpec((block_m, Ep), lambda i: (i, 0)),
        ),
        compiler_params=pltpu.CompilerParams(
            dimension_semantics=("parallel",),
            vmem_limit_bytes=int(min(vmem_cap * 3 // 4, 100 * 1024 * 1024)),
        ),
        cost_estimate=cost,
    )(x2, w1p, b1p, w2p, b2p)

    return out[:N, :E].reshape(B, S, E)


def adapter_reference(x, w1, b1, w2, b2):
    h = jnp.dot(x, w1) + b1
    h = jax.nn.gelu(h, approximate=False)
    return x + (jnp.dot(h, w2) + b2)


if __name__ == "__main__":
    # Small shapes consistent with the module: batch=2, seq=8, embed_dim=32, adapter_dim=16.
    B, S, E, A = 2, 8, 32, 16
    key = jax.random.PRNGKey(0)
    kx, k1, k2, k3, k4 = jax.random.split(key, 5)

    x = jax.random.normal(kx, (B, S, E), dtype=jnp.float32)
    # torch init: normal(std=0.001) on every parameter.  Weights stored (in, out)
    # so the kernel computes x @ W (transpose of the torch nn.Linear layout).
    w1 = 0.001 * jax.random.normal(k1, (E, A), dtype=jnp.float32)
    b1 = 0.001 * jax.random.normal(k2, (A,), dtype=jnp.float32)
    w2 = 0.001 * jax.random.normal(k3, (A, E), dtype=jnp.float32)
    b2 = 0.001 * jax.random.normal(k4, (E,), dtype=jnp.float32)

    # f32 path: must match the exact-erf reference tightly.
    out = jax.block_until_ready(adapter_forward(x, w1, b1, w2, b2))
    ref = adapter_reference(x, w1, b1, w2, b2)
    assert out.shape == (B, S, E)
    assert jnp.allclose(out, ref, atol=1e-5, rtol=1e-5), "f32 mismatch vs reference"

    # bf16 I/O path (MXU-native operands, ~half the HBM traffic); f32 accumulation
    # and f32 residual inside the kernel, looser tolerance from bf16 rounding.
    xb, w1b, w2b = (t.astype(jnp.bfloat16) for t in (x, w1, w2))
    out_bf16 = jax.block_until_ready(adapter_forward(xb, w1b, b1, w2b, b2))
    ref_bf16 = adapter_reference(xb.astype(jnp.float32), w1b.astype(jnp.float32),
                                 b1, w2b.astype(jnp.float32), b2)
    assert out_bf16.dtype == jnp.bfloat16
    assert jnp.allclose(out_bf16.astype(jnp.float32), ref_bf16, atol=5e-2, rtol=5e-2), \
        "bf16 mismatch vs reference"

    print("KERNEL_OK")
</pallas_src>

<mosaic_0001>
module attributes {stable_mosaic.version = 11 : i64} {
  func.func @_adapter_kernel(%arg0: i32, %arg1: memref<16x128xf32, #tpu.memory_space<vmem>>, %arg2: memref<128x128xf32, #tpu.memory_space<vmem>>, %arg3: memref<1x128xf32, #tpu.memory_space<vmem>>, %arg4: memref<128x128xf32, #tpu.memory_space<vmem>>, %arg5: memref<1x128xf32, #tpu.memory_space<vmem>>, %arg6: memref<16x128xf32, #tpu.memory_space<vmem>>) attributes {dimension_semantics = [#tpu.dimension_semantics<parallel>], iteration_bounds = array<i64: 1>, scalar_prefetch = 0 : i64, scratch_operands = 0 : i64, tpu.core_type = #tpu.core_type<tc>, window_params = [{transform_indices = @transform_0, window_bounds = array<i64: 16, 128>}, {pipeline_mode = #tpu.pipeline_mode<synchronous>, transform_indices = @transform_1, window_bounds = array<i64: 128, 128>}, {pipeline_mode = #tpu.pipeline_mode<synchronous>, transform_indices = @transform_2, window_bounds = array<i64: 1, 128>}, {pipeline_mode = #tpu.pipeline_mode<synchronous>, transform_indices = @transform_3, window_bounds = array<i64: 128, 128>}, {pipeline_mode = #tpu.pipeline_mode<synchronous>, transform_indices = @transform_4, window_bounds = array<i64: 1, 128>}, {transform_indices = @transform_5, window_bounds = array<i64: 16, 128>}]} {
    %c0 = arith.constant 0 : index
    %c0_0 = arith.constant 0 : index
    %0 = vector.load %arg1[%c0, %c0_0] : memref<16x128xf32, #tpu.memory_space<vmem>>, vector<16x128xf32>
    %c0_1 = arith.constant 0 : index
    %c0_2 = arith.constant 0 : index
    %1 = vector.load %arg2[%c0_1, %c0_2] : memref<128x128xf32, #tpu.memory_space<vmem>>, vector<128x128xf32>
    %cst = arith.constant dense<0.000000e+00> : vector<16x128xf32>
    %2 = tpu.matmul %0, %1, %cst {dimension_numbers = #tpu.dot_dimension_numbers<[1], [0], [0], [1], [0, 0, 1, 1], [], []>} : vector<16x128xf32>, vector<128x128xf32>, vector<16x128xf32> -> vector<16x128xf32>
    %c0_3 = arith.constant 0 : index
    %c0_4 = arith.constant 0 : index
    %3 = vector.load %arg3[%c0_3, %c0_4] : memref<1x128xf32, #tpu.memory_space<vmem>>, vector<1x128xf32>
    %4 = vector.broadcast %3 : vector<1x128xf32> to vector<16x128xf32>
    %5 = arith.addf %2, %4 : vector<16x128xf32>
    %cst_5 = arith.constant 5.000000e-01 : f32
    %6 = vector.broadcast %cst_5 : f32 to vector<16x128xf32>
    %7 = arith.mulf %6, %5 : vector<16x128xf32>
    %cst_6 = arith.constant 0.707106769 : f32
    %8 = vector.broadcast %cst_6 : f32 to vector<16x128xf32>
    %9 = arith.mulf %5, %8 : vector<16x128xf32>
    %10 = math.erf %9 : vector<16x128xf32>
    %cst_7 = arith.constant 1.000000e+00 : f32
    %11 = vector.broadcast %cst_7 : f32 to vector<16x128xf32>
    %12 = arith.addf %11, %10 : vector<16x128xf32>
    %13 = arith.mulf %7, %12 : vector<16x128xf32>
    %c0_8 = arith.constant 0 : index
    %c0_9 = arith.constant 0 : index
    %14 = vector.load %arg4[%c0_8, %c0_9] : memref<128x128xf32, #tpu.memory_space<vmem>>, vector<128x128xf32>
    %cst_10 = arith.constant dense<0.000000e+00> : vector<16x128xf32>
    %15 = tpu.matmul %13, %14, %cst_10 {dimension_numbers = #tpu.dot_dimension_numbers<[1], [0], [0], [1], [0, 0, 1, 1], [], []>} : vector<16x128xf32>, vector<128x128xf32>, vector<16x128xf32> -> vector<16x128xf32>
    %16 = arith.addf %0, %15 : vector<16x128xf32>
    %c0_11 = arith.constant 0 : index
    %c0_12 = arith.constant 0 : index
    %17 = vector.load %arg5[%c0_11, %c0_12] : memref<1x128xf32, #tpu.memory_space<vmem>>, vector<1x128xf32>
    %18 = vector.broadcast %17 : vector<1x128xf32> to vector<16x128xf32>
    %19 = arith.addf %16, %18 : vector<16x128xf32>
    %c0_13 = arith.constant 0 : index
    %c0_14 = arith.constant 0 : index
    %20 = vector.load %arg6[%c0_13, %c0_14] : memref<16x128xf32, #tpu.memory_space<vmem>>, vector<16x128xf32>
    tpu.vector_store %arg6[%c0_13, %c0_14], %19 {strides = array<i32>} : memref<16x128xf32, #tpu.memory_space<vmem>>, vector<16x128xf32>,
    return
  }
  func.func @transform_0(%arg0: i32) -> (i32, i32) {
    %c0_i32 = arith.constant 0 : i32
    %c0_i32_0 = arith.constant 0 : i32
    return %arg0, %c0_i32 : i32, i32
  }
  func.func @transform_1(%arg0: i32) -> (i32, i32) {
    %c0_i32 = arith.constant 0 : i32
    %c0_i32_0 = arith.constant 0 : i32
    %c0_i32_1 = arith.constant 0 : i32
    return %c0_i32, %c0_i32_0 : i32, i32
  }
  func.func @transform_2(%arg0: i32) -> (i32, i32) {
    %c0_i32 = arith.constant 0 : i32
    %c0_i32_0 = arith.constant 0 : i32
    %c0_i32_1 = arith.constant 0 : i32
    return %c0_i32, %c0_i32_0 : i32, i32
  }
  func.func @transform_3(%arg0: i32) -> (i32, i32) {
    %c0_i32 = arith.constant 0 : i32
    %c0_i32_0 = arith.constant 0 : i32
    %c0_i32_1 = arith.constant 0 : i32
    return %c0_i32, %c0_i32_0 : i32, i32
  }
  func.func @transform_4(%arg0: i32) -> (i32, i32) {
    %c0_i32 = arith.constant 0 : i32
    %c0_i32_0 = arith.constant 0 : i32
    %c0_i32_1 = arith.constant 0 : i32
    return %c0_i32, %c0_i32_0 : i32, i32
  }
  func.func @transform_5(%arg0: i32) -> (i32, i32) {
    %c0_i32 = arith.constant 0 : i32
    %c0_i32_0 = arith.constant 0 : i32
    return %arg0, %c0_i32 : i32, i32
  }
}

</mosaic_0001>

<llo_original>
// kernel: tpu_custom_call.1
$region0: #{tpu_custom_call.1}
  #allocation0 [shape = 'u32[]', space=smem, size = 0x4, offset = 0x4, fixed_abs, tag = 'smem constant byte address 0x4 - core index']
  #allocation1 [shape = 'u32[144,128]{1,0:T(1,128)}', space=vmem, size = 0x12000, scoped, tag = 'internal scratch']
  %s0 = inlined_call_operand.hbm [shape: f32[16,128], index: 0, kind: input, shape index: {}]
  %s1 = inlined_call_operand.hbm [shape: f32[128,128], index: 1, kind: input, shape index: {}]
  %s2 = inlined_call_operand.vmem [shape: f32[1,128], index: 2, kind: input, shape index: {}]
  %s3 = inlined_call_operand.hbm [shape: f32[128,128], index: 3, kind: input, shape index: {}]
  %s4 = inlined_call_operand.vmem [shape: f32[1,128], index: 4, kind: input, shape index: {}]
  %s5 = inlined_call_operand.hbm [shape: f32[16,128], index: 5, kind: output, shape index: {}]
  %s6 = sld [smem:[#allocation0]]
  $region42: #{tpu_custom_call.1} parent=0
    _
  %s8 = ssub.s32 1, %s6
  %s9 = scalar_select 0, %s8, %s6
  $region1: #{tpu_custom_call.1} parent=0
    #allocation2 [shape = 'u8[8192]{0}', space=vmem, size = 0x2000, scoped, tag = 'input window, operand 0, single buffered']
    #allocation3 [shape = 's32[1]{0}', space=sflag, size = 0x4, scoped, tag = 'scoped memory for tpu_custom_call.1']
    #allocation4 [shape = 's32[1]{0}', space=sflag, size = 0x4, scoped, tag = 'scoped memory for tpu_custom_call.1']
    #allocation5 [shape = 'u8[65536]{0}', space=vmem, size = 0x10000, scoped, tag = 'input window, operand 1, single buffered']
    #allocation6 [shape = 's32[1]{0}', space=sflag, size = 0x4, scoped, tag = 'scoped memory for tpu_custom_call.1']
    #allocation7 [shape = 'u8[65536]{0}', space=vmem, size = 0x10000, scoped, tag = 'input window, operand 3, single buffered']
    #allocation8 [shape = 'u8[8192]{0}', space=vmem, size = 0x2000, scoped, tag = 'output window, operand 0, single buffered']
    %10 = vsyncpa [#allocation3], 0
    %11 = vsyncpa [#allocation6], 0
    %12 = vsyncpa [#allocation4], 0
    // Predicated region
    $region2: #{tpu_custom_call.1} parent=1 // pred_check
      _
    $region3: #{tpu_custom_call.1} parent=1 // pred_check_branch
      %14 = sbr.rel (0) target = $region5
    $region4: #{tpu_custom_call.1} parent=1 // pred_region
      %s16 = ssub.s32 256, 256
      %17 = vsyncadd [#allocation3], %s16
      %s18 = sshll.u32 [#allocation2], 4
      %s19 = int_to_ptr.vmem [resolvable:$true] %s18
      %24 = dma.hbm_to_vmem [thread:$0]  %s0, 256, %s19, [#allocation3], 128, 128, 8
    $region5: #{tpu_custom_call.1} parent=1 // pred_fallthru
      _
    // Predicated region
    $region6: #{tpu_custom_call.1} parent=1 // pred_check
      _
    $region7: #{tpu_custom_call.1} parent=1 // pred_check_branch
      %26 = sbr.rel (0) target = $region9
    $region8: #{tpu_custom_call.1} parent=1 // pred_region
      %s28 = ssub.s32 2048, 2048
      %29 = vsyncadd [#allocation6], %s28
      %s30 = sshll.u32 [#allocation5], 4
      %s31 = int_to_ptr.vmem [resolvable:$true] %s30
      %36 = dma.hbm_to_vmem [thread:$0]  %s1, 2048, %s31, [#allocation6], 128, 128, 8
    $region9: #{tpu_custom_call.1} parent=1 // pred_fallthru
      _
    // Predicated region
    $region10: #{tpu_custom_call.1} parent=1 // pred_check
      _
    $region11: #{tpu_custom_call.1} parent=1 // pred_check_branch
      %38 = sbr.rel (0) target = $region13
    $region12: #{tpu_custom_call.1} parent=1 // pred_region
      _
    $region13: #{tpu_custom_call.1} parent=1 // pred_fallthru
      _
    // Predicated region
    $region14: #{tpu_custom_call.1} parent=1 // pred_check
      _
    $region15: #{tpu_custom_call.1} parent=1 // pred_check_branch
      %40 = sbr.rel (0) target = $region17
    $region16: #{tpu_custom_call.1} parent=1 // pred_region
      %s42 = ssub.s32 2048, 2048
      %43 = vsyncadd [#allocation6], %s42
      %s44 = sshll.u32 [#allocation7], 4
      %s45 = int_to_ptr.vmem [resolvable:$true] %s44
      %50 = dma.hbm_to_vmem [thread:$0]  %s3, 2048, %s45, [#allocation6], 128, 128, 8
    $region17: #{tpu_custom_call.1} parent=1 // pred_fallthru
      _
    // Predicated region
    $region18: #{tpu_custom_call.1} parent=1 // pred_check
      _
    $region19: #{tpu_custom_call.1} parent=1 // pred_check_branch
      %52 = sbr.rel (0) target = $region21
    $region20: #{tpu_custom_call.1} parent=1 // pred_region
      _
    $region21: #{tpu_custom_call.1} parent=1 // pred_fallthru
      _
    // Predicated region
    $region22: #{tpu_custom_call.1} parent=1 // pred_check
      _
    $region23: #{tpu_custom_call.1} parent=1 // pred_check_branch
      %54 = sbr.rel (0) target = $region25
    $region24: #{tpu_custom_call.1} parent=1 // pred_region
      %55 = dma.done [#allocation3], 256
    $region25: #{tpu_custom_call.1} parent=1 // pred_fallthru
      _
    // Predicated region
    $region26: #{tpu_custom_call.1} parent=1 // pred_check
      _
    $region27: #{tpu_custom_call.1} parent=1 // pred_check_branch
      %57 = sbr.rel (0) target = $region29
    $region28: #{tpu_custom_call.1} parent=1 // pred_region
      %58 = dma.done [#allocation6], 2048
    $region29: #{tpu_custom_call.1} parent=1 // pred_fallthru
      _
    // Predicated region
    $region30: #{tpu_custom_call.1} parent=1 // pred_check
      _
    $region31: #{tpu_custom_call.1} parent=1 // pred_check_branch
      %60 = sbr.rel (0) target = $region33
    $region32: #{tpu_custom_call.1} parent=1 // pred_region
      %61 = dma.done [#allocation6], 2048
    $region33: #{tpu_custom_call.1} parent=1 // pred_fallthru
      _
    %v62 = vld [vmem:[#allocation2] sm:$0xff]
    %v63 = vld [vmem:[#allocation2 + $0x8] sm:$0xff]
    %v64 = vld [vmem:[#allocation5] sm:$0xff]
    %v65 = vld [vmem:[#allocation5 + $0x8] sm:$0xff]
    %v66 = vld [vmem:[#allocation5 + $0x10] sm:$0xff]
    %v67 = vld [vmem:[#allocation5 + $0x18] sm:$0xff]
    %v68 = vld [vmem:[#allocation5 + $0x20] sm:$0xff]
    %v69 = vld [vmem:[#allocation5 + $0x28] sm:$0xff]
    %v70 = vld [vmem:[#allocation5 + $0x30] sm:$0xff]
    %v71 = vld [vmem:[#allocation5 + $0x38] sm:$0xff]
    %v72 = vld [vmem:[#allocation5 + $0x40] sm:$0xff]
    %v73 = vld [vmem:[#allocation5 + $0x48] sm:$0xff]
    %v74 = vld [vmem:[#allocation5 + $0x50] sm:$0xff]
    %v75 = vld [vmem:[#allocation5 + $0x58] sm:$0xff]
    %v76 = vld [vmem:[#allocation5 + $0x60] sm:$0xff]
    %v77 = vld [vmem:[#allocation5 + $0x68] sm:$0xff]
    %v78 = vld [vmem:[#allocation5 + $0x70] sm:$0xff]
    %v79 = vld [vmem:[#allocation5 + $0x78] sm:$0xff]
    %v80 = vld [vmem:[%s2] sm:$0x1]
    %v82 = vlaneseq
    %v83 = vshrl.u32 %v82, 7
    %v84 = vsub.s32 0, %v83
    %v85 = vrot.slane %v80, %v84
    %87 = vmatprep.subr.mxu0 0.0
    %88 = vmatpush1.msra.mxu0 %v79
    %89 = vmatprep.subr.mxu0 0.0
    %90 = vmatpush1.msra.mxu0 %v78
    %91 = vmatprep.subr.mxu0 0.0
    %92 = vmatpush1.msra.mxu0 %v77
    %93 = vmatprep.subr.mxu0 0.0
    %94 = vmatpush1.msra.mxu0 %v76
    %95 = vmatprep.subr.mxu0 0.0
    %96 = vmatpush1.msra.mxu0 %v75
    %97 = vmatprep.subr.mxu0 0.0
    %98 = vmatpush1.msra.mxu0 %v74
    %99 = vmatprep.subr.mxu0 0.0
    %100 = vmatpush1.msra.mxu0 %v73
    %101 = vmatprep.subr.mxu0 0.0
    %102 = vmatpush1.msra.mxu0 %v72
    %103 = vmatprep.subr.mxu0 0.0
    %104 = vmatpush1.msra.mxu0 %v71
    %105 = vmatprep.subr.mxu0 0.0
    %106 = vmatpush1.msra.mxu0 %v70
    %107 = vmatprep.subr.mxu0 0.0
    %108 = vmatpush1.msra.mxu0 %v69
    %109 = vmatprep.subr.mxu0 0.0
    %110 = vmatpush1.msra.mxu0 %v68
    %111 = vmatprep.subr.mxu0 0.0
    %112 = vmatpush1.msra.mxu0 %v67
    %113 = vmatprep.subr.mxu0 0.0
    %114 = vmatpush1.msra.mxu0 %v66
    %115 = vmatprep.subr.mxu0 0.0
    %116 = vmatpush1.msra.mxu0 %v65
    %117 = vmatprep.subr.mxu0 0.0
    %118 = vmatpush1.msra.mxu0 %v64
    %119 = vmatprep.subr.mxu0 0.0
    %120 = vmatpush2.msra.mxu0 0.0
    %121 = vmatprep.subr.mxu0 0.0
    %122 = vmatpush2.msra.mxu0 0.0
    %123 = vmatprep.subr.mxu0 0.0
    %124 = vmatpush2.msra.mxu0 0.0
    %125 = vmatprep.subr.mxu0 0.0
    %126 = vmatpush2.msra.mxu0 0.0
    %127 = vmatprep.subr.mxu0 0.0
    %128 = vmatpush2.msra.mxu0 0.0
    %129 = vmatprep.subr.mxu0 0.0
    %130 = vmatpush2.msra.mxu0 0.0
    %131 = vmatprep.subr.mxu0 0.0
    %132 = vmatpush2.msra.mxu0 0.0
    %133 = vmatprep.subr.mxu0 0.0
    %134 = vmatpush2.msra.mxu0 0.0
    %135 = vmatprep.subr.mxu0 0.0
    %136 = vmatpush2.msra.mxu0 0.0
    %137 = vmatprep.subr.mxu0 0.0
    %138 = vmatpush2.msra.mxu0 0.0
    %139 = vmatprep.subr.mxu0 0.0
    %140 = vmatpush2.msra.mxu0 0.0
    %141 = vmatprep.subr.mxu0 0.0
    %142 = vmatpush2.msra.mxu0 0.0
    %143 = vmatprep.subr.mxu0 0.0
    %144 = vmatpush2.msra.mxu0 0.0
    %145 = vmatprep.subr.mxu0 0.0
    %146 = vmatpush2.msra.mxu0 0.0
    %147 = vmatprep.subr.mxu0 0.0
    %148 = vmatpush2.msra.mxu0 0.0
    %149 = vmatprep.subr.mxu0 0.0
    %150 = vmatpush2.msra.mxu0 0.0
    %151 = vmatprep.mubr.f32.mxu0 0.0
    %152 = vmatmul.mubr.f32.gmra.mxu0 %v62
    %v153 = vpop.f32.mrf.mxu0
    %v154 = vadd.f32 %v85, %v153
    %v155 = vpop.f32.mrf.mxu0
    %156 = vmatprep.mubr.f32.mxu0 0.0
    %157 = vmatmul.mubr.f32.gmra.mxu0 %v63
    %v158 = vpop.f32.mrf.mxu0
    %v159 = vadd.f32 %v85, %v158
    %v160 = vpop.f32.mrf.mxu0
    %161 = vdwg.mxu0
    %v162 = vmul.f32 %v154, 0.5
    %v163 = vmul.f32 %v159, 0.5
    %v164 = vmul.f32 %v154, 0.70710677
    %v165 = vmul.f32 %v159, 0.70710677
    %v166 = verf.f32.pop %v164
    %v167 = verf.f32.pop %v165
    %v168 = vadd.f32 %v166, 1.0
    %v169 = vadd.f32 %v167, 1.0
    %v170 = vmul.f32 %v162, %v168
    %v171 = vmul.f32 %v163, %v169
    %v172 = vld [vmem:[#allocation7] sm:$0xff]
    %v173 = vld [vmem:[#allocation7 + $0x8] sm:$0xff]
    %v174 = vld [vmem:[#allocation7 + $0x10] sm:$0xff]
    %v175 = vld [vmem:[#allocation7 + $0x18] sm:$0xff]
    %v176 = vld [vmem:[#allocation7 + $0x20] sm:$0xff]
    %v177 = vld [vmem:[#allocation7 + $0x28] sm:$0xff]
    %v178 = vld [vmem:[#allocation7 + $0x30] sm:$0xff]
    %v179 = vld [vmem:[#allocation7 + $0x38] sm:$0xff]
    %v180 = vld [vmem:[#allocation7 + $0x40] sm:$0xff]
    %v181 = vld [vmem:[#allocation7 + $0x48] sm:$0xff]
    %v182 = vld [vmem:[#allocation7 + $0x50] sm:$0xff]
    %v183 = vld [vmem:[#allocation7 + $0x58] sm:$0xff]
    %v184 = vld [vmem:[#allocation7 + $0x60] sm:$0xff]
    %v185 = vld [vmem:[#allocation7 + $0x68] sm:$0xff]
    %v186 = vld [vmem:[#allocation7 + $0x70] sm:$0xff]
    %v187 = vld [vmem:[#allocation7 + $0x78] sm:$0xff]
    %188 = vmatprep.subr.mxu0 0.0
    %189 = vmatpush1.msra.mxu0 %v187
    %190 = vmatprep.subr.mxu0 0.0
    %191 = vmatpush1.msra.mxu0 %v186
    %192 = vmatprep.subr.mxu0 0.0
    %193 = vmatpush1.msra.mxu0 %v185
    %194 = vmatprep.subr.mxu0 0.0
    %195 = vmatpush1.msra.mxu0 %v184
    %196 = vmatprep.subr.mxu0 0.0
    %197 = vmatpush1.msra.mxu0 %v183
    %198 = vmatprep.subr.mxu0 0.0
    %199 = vmatpush1.msra.mxu0 %v182
    %200 = vmatprep.subr.mxu0 0.0
    %201 = vmatpush1.msra.mxu0 %v181
    %202 = vmatprep.subr.mxu0 0.0
    %203 = vmatpush1.msra.mxu0 %v180
    %204 = vmatprep.subr.mxu0 0.0
    %205 = vmatpush1.msra.mxu0 %v179
    %206 = vmatprep.subr.mxu0 0.0
    %207 = vmatpush1.msra.mxu0 %v178
    %208 = vmatprep.subr.mxu0 0.0
    %209 = vmatpush1.msra.mxu0 %v177
    %210 = vmatprep.subr.mxu0 0.0
    %211 = vmatpush1.msra.mxu0 %v176
    %212 = vmatprep.subr.mxu0 0.0
    %213 = vmatpush1.msra.mxu0 %v175
    %214 = vmatprep.subr.mxu0 0.0
    %215 = vmatpush1.msra.mxu0 %v174
    %216 = vmatprep.subr.mxu0 0.0
    %217 = vmatpush1.msra.mxu0 %v173
    %218 = vmatprep.subr.mxu0 0.0
    %219 = vmatpush1.msra.mxu0 %v172
    %220 = vmatprep.subr.mxu0 0.0
    %221 = vmatpush2.msra.mxu0 0.0
    %222 = vmatprep.subr.mxu0 0.0
    %223 = vmatpush2.msra.mxu0 0.0
    %224 = vmatprep.subr.mxu0 0.0
    %225 = vmatpush2.msra.mxu0 0.0
    %226 = vmatprep.subr.mxu0 0.0
    %227 = vmatpush2.msra.mxu0 0.0
    %228 = vmatprep.subr.mxu0 0.0
    %229 = vmatpush2.msra.mxu0 0.0
    %230 = vmatprep.subr.mxu0 0.0
    %231 = vmatpush2.msra.mxu0 0.0
    %232 = vmatprep.subr.mxu0 0.0
    %233 = vmatpush2.msra.mxu0 0.0
    %234 = vmatprep.subr.mxu0 0.0
    %235 = vmatpush2.msra.mxu0 0.0
    %236 = vmatprep.subr.mxu0 0.0
    %237 = vmatpush2.msra.mxu0 0.0
    %238 = vmatprep.subr.mxu0 0.0
    %239 = vmatpush2.msra.mxu0 0.0
    %240 = vmatprep.subr.mxu0 0.0
    %241 = vmatpush2.msra.mxu0 0.0
    %242 = vmatprep.subr.mxu0 0.0
    %243 = vmatpush2.msra.mxu0 0.0
    %244 = vmatprep.subr.mxu0 0.0
    %245 = vmatpush2.msra.mxu0 0.0
    %246 = vmatprep.subr.mxu0 0.0
    %247 = vmatpush2.msra.mxu0 0.0
    %248 = vmatprep.subr.mxu0 0.0
    %249 = vmatpush2.msra.mxu0 0.0
    %250 = vmatprep.subr.mxu0 0.0
    %251 = vmatpush2.msra.mxu0 0.0
    %252 = vmatprep.mubr.f32.mxu0 0.0
    %253 = vmatmul.mubr.f32.gmra.mxu0 %v170
    %v254 = vpop.f32.mrf.mxu0
    %v255 = vadd.f32 0.0, %v254
    %v256 = vpop.f32.mrf.mxu0
    %257 = vmatprep.mubr.f32.mxu0 0.0
    %258 = vmatmul.mubr.f32.gmra.mxu0 %v171
    %v259 = vpop.f32.mrf.mxu0
    %v260 = vadd.f32 0.0, %v259
    %v261 = vpop.f32.mrf.mxu0
    %262 = vdwg.mxu0
    %v263 = vadd.f32 %v62, %v255
    %v264 = vadd.f32 %v63, %v260
    %v265 = vld [vmem:[%s4] sm:$0x1]
    %v267 = vlaneseq
    %v268 = vshrl.u32 %v267, 7
    %v269 = vsub.s32 0, %v268
    %v270 = vrot.slane %v265, %v269
    %v272 = vadd.f32 %v263, %v270
    %v273 = vadd.f32 %v264, %v270
    %274 = vst [vmem:[#allocation8] sm:$0xff] %v272
    %275 = vst [vmem:[#allocation8 + $0x8] sm:$0xff] %v273
    // Predicated region
    $region34: #{tpu_custom_call.1} parent=1 // pred_check
      _
    $region35: #{tpu_custom_call.1} parent=1 // pred_check_branch
      %277 = sbr.rel (0) target = $region37
    $region36: #{tpu_custom_call.1} parent=1 // pred_region
      %s279 = ssub.s32 256, 256
      %280 = vsyncadd [#allocation4], %s279
      %s281 = sshll.u32 [#allocation8], 4
      %s282 = int_to_ptr.vmem [resolvable:$true] %s281
      %287 = dma.vmem_to_hbm [thread:$0]  %s282, 256, %s5, [#allocation4], 128, 128, 8
    $region37: #{tpu_custom_call.1} parent=1 // pred_fallthru
      _
    // Predicated region
    $region38: #{tpu_custom_call.1} parent=1 // pred_check
      _
    $region39: #{tpu_custom_call.1} parent=1 // pred_check_branch
      %289 = sbr.rel (0) target = $region41
    $region40: #{tpu_custom_call.1} parent=1 // pred_region
      %290 = dma.done [#allocation4], 256
    $region41: #{tpu_custom_call.1} parent=1 // pred_fallthru
      _
    %291 = vsyncpa [#allocation3], 1
    %292 = vsyncpa [#allocation6], 1
    %293 = vsyncpa [#allocation4], 1

</llo_original>
